<compile_context>
chip_gen: v5e
topology: v5e:2x2
jax: 0.10.0
libtpu: 0.0.40
codegen_flags: <defaults>
</compile_context>

<pallas_src>
import functools

import jax
import jax.numpy as jnp
from jax import lax
from jax.experimental import pallas as pl
from jax.experimental.pallas import tpu as pltpu


# ----------------------------------------------------------------------------- #
# In-kernel helpers
# ----------------------------------------------------------------------------- #
def _sum3(a, axis):
    """Zero-padded 3-tap window sum along `axis` of a 2-D array.

    out[i] = a[i-1] + a[i] + a[i+1] with out-of-range elements taken as 0.
    Built from two cyclic rolls plus a boundary correction, so it only uses
    VPU/XLU ops (exact f32) and is agnostic to the roll direction convention.
    """
    n = a.shape[axis]
    idx = lax.broadcasted_iota(jnp.int32, a.shape, axis)
    raw = a + pltpu.roll(a, 1, axis) + pltpu.roll(a, n - 1, axis)
    if axis == 0:
        first = jnp.broadcast_to(a[:1, :], a.shape)       # a[0, :]  broadcast
        last = jnp.broadcast_to(a[n - 1:, :], a.shape)    # a[n-1, :] broadcast
    else:
        first = jnp.broadcast_to(a[:, :1], a.shape)       # a[:, 0]  broadcast
        last = jnp.broadcast_to(a[:, n - 1:], a.shape)    # a[:, n-1] broadcast
    # Position 0 must not see the wrapped-around last element; position n-1
    # must not see the wrapped-around first element.
    return raw - jnp.where(idx == 0, last, 0.0) - jnp.where(idx == n - 1, first, 0.0)


def _edge_conv3x3(a):
    """F.conv2d(a, filt, padding=1) with filt = ones(3,3) except center = -8.

    Equals (3x3 zero-padded window sum) - 9 * center; the window sum is separable.
    """
    # TODO(synk): radius > 1 variant of the module's filter is not implemented
    # (the module default radius=1 / 3x3 stencil is what ECELoss uses).
    return _sum3(_sum3(a, 1), 0) - 9.0 * a


def _fullsum(a):
    """(H, W) -> (1, 1) sum; the only cross-lane reductions, done in the epilogue."""
    return jnp.sum(jnp.sum(a, axis=1, keepdims=True), axis=0, keepdims=True)


# ----------------------------------------------------------------------------- #
# Kernel: one grid step == one batch sample
# ----------------------------------------------------------------------------- #
def _ece_kernel(logits_ref, labels_ref, bce_ref, dice_ref, *, alpha, smooth):
    C = logits_ref.shape[1]
    H = logits_ref.shape[2]
    W = logits_ref.shape[3]

    lbl = labels_ref[0, :, :]                      # (H, W) int32 class ids
    lblf = lbl.astype(jnp.float32)

    # ---- label edge map: 1 - (conv3x3(label) == 0) --------------------------
    lconv = _edge_conv3x3(lblf)                    # integer-valued, exact in f32
    lbedge = (jnp.abs(lconv) > 0.5).astype(jnp.float32)

    # ---- per-channel edge conv on predictions + BCE terms --------------------
    norm = jnp.zeros((H, W), jnp.float32)
    bce_terms = jnp.zeros((H, W), jnp.float32)
    for c in range(C):                             # C is static & small (n_classes)
        xc = logits_ref[0, c, :, :]                # (H, W) probabilities
        ec = _edge_conv3x3(xc)
        norm = norm + ec * ec                      # sum over channels of conv^2
        y = (lbl == c).astype(jnp.float32)         # one-hot channel c
        log_p = jnp.maximum(jnp.log(xc), -100.0)          # BCELoss clamps log at -100
        log_q = jnp.maximum(jnp.log(1.0 - xc), -100.0)
        bce_terms = bce_terms + y * log_p + (1.0 - y) * log_q

    prededge = norm / (norm + alpha)               # norm / (norm + alpha), in [0, 1)

    # ---- per-sample partial outputs ------------------------------------------
    bce_ref[0, :, :] = -_fullsum(bce_terms)                         # (1, 1)

    # BinaryDiceLoss(smooth, p=2) of (prededge, lbedge); p == 2 -> multiplies.
    inter = _fullsum(prededge * lbedge)
    sq = _fullsum(prededge * prededge + lbedge * lbedge)
    num = 2.0 * inter + smooth
    den = sq + smooth
    dice_ref[0, :, :] = 1.0 - num * pl.reciprocal(den, approx=False)


# ----------------------------------------------------------------------------- #
# Wrapper
# ----------------------------------------------------------------------------- #
def ece_loss(logits, labels, *, alpha=1.0, beta=0.1, smooth=1.0):
    """ECELoss forward: BCE(logits, one_hot(labels)) + beta * EdgeLoss(logits, labels).

    logits: (N, C, H, W) float probabilities in (0, 1); the reference module
            requires C == 2 (it one-hots labels with 2 classes).
    labels: (N, H, W) integer class ids in {0, 1}.
    """
    N, C, H, W = logits.shape
    assert labels.shape == (N, H, W), "logits / labels batch or spatial mismatch"
    logits = logits.astype(jnp.float32)
    labels = labels.astype(jnp.int32)

    kernel = functools.partial(_ece_kernel, alpha=float(alpha), smooth=float(smooth))

    # VMEM budget: double-buffered input blocks + in-kernel temporaries, capped
    # to stay inside v7x's 64 MiB physical VMEM.
    # TODO(synk): spatial (H, W) tiling with halo exchange for images too large
    # to keep a whole sample resident in VMEM.
    block_bytes = (C * H * W + H * W) * 4
    vmem_est = 4 * block_bytes + 24 * H * W * 4 + (1 << 20)
    vmem_limit = int(min(max(vmem_est, 32 << 20), 64 << 20))

    bce_sums, dice_losses = pl.pallas_call(
        kernel,
        out_shape=(
            jax.ShapeDtypeStruct((N, 1, 1), jnp.float32),   # per-sample BCE sums
            jax.ShapeDtypeStruct((N, 1, 1), jnp.float32),   # per-sample dice loss
        ),
        grid_spec=pltpu.PrefetchScalarGridSpec(
            num_scalar_prefetch=0,
            grid=(N,),
            in_specs=[
                pl.BlockSpec((1, C, H, W), lambda n: (n, 0, 0, 0)),
                pl.BlockSpec((1, H, W), lambda n: (n, 0, 0)),
            ],
            out_specs=[
                pl.BlockSpec((1, 1, 1), lambda n: (n, 0, 0)),
                pl.BlockSpec((1, 1, 1), lambda n: (n, 0, 0)),
            ],
        ),
        compiler_params=pltpu.CompilerParams(
            dimension_semantics=("parallel",),      # batch axis -> both v7x TCs
            vmem_limit_bytes=vmem_limit,
        ),
    )(logits, labels)

    bce = jnp.sum(bce_sums) / (N * C * H * W)       # nn.BCELoss(reduction='mean')
    dice = jnp.sum(dice_losses) / N                 # dice: mean over batch
    if beta > 0:
        return bce + beta * dice
    return bce


# ----------------------------------------------------------------------------- #
# Pure-JAX reference (mirrors the PyTorch module)
# ----------------------------------------------------------------------------- #
def _reference_ece(logits, labels, *, alpha=1.0, beta=0.1, smooth=1.0, radius=1):
    N, C, H, W = logits.shape
    p = logits.astype(jnp.float32)

    onehot = jax.nn.one_hot(labels, C, dtype=jnp.float32)          # (N, H, W, C)
    onehot = jnp.transpose(onehot, (0, 3, 1, 2))                   # (N, C, H, W)
    bce = -jnp.mean(onehot * jnp.maximum(jnp.log(p), -100.0)
                    + (1.0 - onehot) * jnp.maximum(jnp.log(1.0 - p), -100.0))

    ks = 2 * radius + 1
    filt = jnp.ones((ks, ks), jnp.float32).at[radius, radius].set(-8.0)
    dn = ("NCHW", "OIHW", "NCHW")
    pad = [(radius, radius), (radius, radius)]

    lbedge = lax.conv_general_dilated(
        labels.astype(jnp.float32)[:, None], filt[None, None], (1, 1), pad,
        dimension_numbers=dn, precision=lax.Precision.HIGHEST)
    lbedge = (lbedge != 0).astype(jnp.float32)                     # 1 - eq(x, 0)

    filt2 = jnp.broadcast_to(filt[None, None], (C, 1, ks, ks))
    prededge = lax.conv_general_dilated(
        p, filt2, (1, 1), pad, dimension_numbers=dn, feature_group_count=C,
        precision=lax.Precision.HIGHEST)
    norm = jnp.sum(prededge ** 2, axis=1, keepdims=True)
    prededge = norm / (norm + alpha)

    pr = prededge.reshape(N, -1)
    tg = lbedge.reshape(N, -1)
    num = 2.0 * jnp.sum(pr * tg, axis=1) + smooth
    den = jnp.sum(pr ** 2 + tg ** 2, axis=1) + smooth
    dice = jnp.sum(1.0 - num / den) / N
    if beta > 0:
        return bce + beta * dice
    return bce


if __name__ == "__main__":
    key = jax.random.PRNGKey(0)
    k1, k2 = jax.random.split(key)
    # n_classes must equal 2 for the module's forward (one_hot(labels, 2)) to be
    # shape-consistent with both BCELoss and the grouped edge conv.
    N, C, H, W = 2, 2, 16, 16
    logits = jax.nn.sigmoid(jax.random.normal(k1, (N, C, H, W), dtype=jnp.float32))
    labels = (jax.random.uniform(k2, (N, H, W)) > 0.5).astype(jnp.int32)

    loss = ece_loss(logits, labels, alpha=1.0, beta=0.1, smooth=1.0)
    jax.block_until_ready(loss)

    ref = _reference_ece(logits, labels, alpha=1.0, beta=0.1, smooth=1.0)
    assert jnp.allclose(loss, ref, atol=1e-4, rtol=1e-4), (loss, ref)
    print("KERNEL_OK")
</pallas_src>

<mosaic_0001>
module attributes {stable_mosaic.version = 11 : i64} {
  func.func @_ece_kernel(%arg0: i32, %arg1: memref<1x2x16x16xf32, #tpu.memory_space<vmem>>, %arg2: memref<1x16x16xi32, #tpu.memory_space<vmem>>, %arg3: memref<1x1x1xf32, #tpu.memory_space<vmem>>, %arg4: memref<1x1x1xf32, #tpu.memory_space<vmem>>) attributes {dimension_semantics = [#tpu.dimension_semantics<parallel>], iteration_bounds = array<i64: 2>, scalar_prefetch = 0 : i64, scratch_operands = 0 : i64, tpu.core_type = #tpu.core_type<tc>, window_params = [{transform_indices = @transform_0, window_bounds = array<i64: 1, 2, 16, 16>}, {transform_indices = @transform_1, window_bounds = array<i64: 1, 16, 16>}, {transform_indices = @transform_2, window_bounds = array<i64: 1, 1, 1>}, {transform_indices = @transform_3, window_bounds = array<i64: 1, 1, 1>}]} {
    %c0 = arith.constant 0 : index
    %c0_0 = arith.constant 0 : index
    %c0_1 = arith.constant 0 : index
    %0 = vector.load %arg2[%c0, %c0_0, %c0_1] : memref<1x16x16xi32, #tpu.memory_space<vmem>>, vector<1x16x16xi32>
    %1 = vector.shape_cast %0 : vector<1x16x16xi32> to vector<16x16xi32>
    %2 = arith.sitofp %1 : vector<16x16xi32> to vector<16x16xf32>
    %3 = tpu.iota {dimensions = array<i32: 1>} : vector<16x16xi32>
    %c1_i32 = arith.constant 1 : i32
    %4 = tpu.dynamic_rotate %2 by %c1_i32 dim 1 : vector<16x16xf32>, i32 -> vector<16x16xf32>
    %5 = arith.addf %2, %4 : vector<16x16xf32>
    %c15_i32 = arith.constant 15 : i32
    %6 = tpu.dynamic_rotate %2 by %c15_i32 dim 1 : vector<16x16xf32>, i32 -> vector<16x16xf32>
    %7 = arith.addf %5, %6 : vector<16x16xf32>
    %8 = vector.extract_strided_slice %2 {offsets = [0, 0], sizes = [16, 1], strides = [1, 1]} : vector<16x16xf32> to vector<16x1xf32>
    %9 = vector.shape_cast %8 : vector<16x1xf32> to vector<16x1xf32>
    %10 = vector.broadcast %9 : vector<16x1xf32> to vector<16x16xf32>
    %11 = vector.extract_strided_slice %2 {offsets = [0, 15], sizes = [16, 1], strides = [1, 1]} : vector<16x16xf32> to vector<16x1xf32>
    %12 = vector.shape_cast %11 : vector<16x1xf32> to vector<16x1xf32>
    %13 = vector.broadcast %12 : vector<16x1xf32> to vector<16x16xf32>
    %c0_i32 = arith.constant 0 : i32
    %14 = vector.broadcast %c0_i32 : i32 to vector<16x16xi32>
    %15 = arith.cmpi eq, %3, %14 : vector<16x16xi32>
    %cst = arith.constant 0.000000e+00 : f32
    %16 = vector.broadcast %cst : f32 to vector<16x16xf32>
    %17 = arith.select %15, %13, %16 : vector<16x16xi1>, vector<16x16xf32>
    %18 = arith.subf %7, %17 : vector<16x16xf32>
    %c15_i32_2 = arith.constant 15 : i32
    %19 = vector.broadcast %c15_i32_2 : i32 to vector<16x16xi32>
    %20 = arith.cmpi eq, %3, %19 : vector<16x16xi32>
    %cst_3 = arith.constant 0.000000e+00 : f32
    %21 = vector.broadcast %cst_3 : f32 to vector<16x16xf32>
    %22 = arith.select %20, %10, %21 : vector<16x16xi1>, vector<16x16xf32>
    %23 = arith.subf %18, %22 : vector<16x16xf32>
    %24 = tpu.iota {dimensions = array<i32: 0>} : vector<16x16xi32>
    %c1_i32_4 = arith.constant 1 : i32
    %25 = tpu.dynamic_rotate %23 by %c1_i32_4 dim 0 : vector<16x16xf32>, i32 -> vector<16x16xf32>
    %26 = arith.addf %23, %25 : vector<16x16xf32>
    %c15_i32_5 = arith.constant 15 : i32
    %27 = tpu.dynamic_rotate %23 by %c15_i32_5 dim 0 : vector<16x16xf32>, i32 -> vector<16x16xf32>
    %28 = arith.addf %26, %27 : vector<16x16xf32>
    %29 = vector.extract_strided_slice %23 {offsets = [0, 0], sizes = [1, 16], strides = [1, 1]} : vector<16x16xf32> to vector<1x16xf32>
    %30 = vector.shape_cast %29 : vector<1x16xf32> to vector<1x16xf32>
    %31 = vector.broadcast %30 : vector<1x16xf32> to vector<16x16xf32>
    %32 = vector.extract_strided_slice %23 {offsets = [15, 0], sizes = [1, 16], strides = [1, 1]} : vector<16x16xf32> to vector<1x16xf32>
    %33 = vector.shape_cast %32 : vector<1x16xf32> to vector<1x16xf32>
    %34 = vector.broadcast %33 : vector<1x16xf32> to vector<16x16xf32>
    %c0_i32_6 = arith.constant 0 : i32
    %35 = vector.broadcast %c0_i32_6 : i32 to vector<16x16xi32>
    %36 = arith.cmpi eq, %24, %35 : vector<16x16xi32>
    %cst_7 = arith.constant 0.000000e+00 : f32
    %37 = vector.broadcast %cst_7 : f32 to vector<16x16xf32>
    %38 = arith.select %36, %34, %37 : vector<16x16xi1>, vector<16x16xf32>
    %39 = arith.subf %28, %38 : vector<16x16xf32>
    %c15_i32_8 = arith.constant 15 : i32
    %40 = vector.broadcast %c15_i32_8 : i32 to vector<16x16xi32>
    %41 = arith.cmpi eq, %24, %40 : vector<16x16xi32>
    %cst_9 = arith.constant 0.000000e+00 : f32
    %42 = vector.broadcast %cst_9 : f32 to vector<16x16xf32>
    %43 = arith.select %41, %31, %42 : vector<16x16xi1>, vector<16x16xf32>
    %44 = arith.subf %39, %43 : vector<16x16xf32>
    %cst_10 = arith.constant 9.000000e+00 : f32
    %45 = vector.broadcast %cst_10 : f32 to vector<16x16xf32>
    %46 = arith.mulf %45, %2 : vector<16x16xf32>
    %47 = arith.subf %44, %46 : vector<16x16xf32>
    %48 = math.absf %47 : vector<16x16xf32>
    %cst_11 = arith.constant 5.000000e-01 : f32
    %49 = vector.broadcast %cst_11 : f32 to vector<16x16xf32>
    %50 = arith.cmpf ogt, %48, %49 : vector<16x16xf32>
    %51 = arith.extui %50 : vector<16x16xi1> to vector<16x16xi32>
    %52 = arith.sitofp %51 : vector<16x16xi32> to vector<16x16xf32>
    %cst_12 = arith.constant 0.000000e+00 : f32
    %53 = vector.broadcast %cst_12 : f32 to vector<16x16xf32>
    %cst_13 = arith.constant 0.000000e+00 : f32
    %54 = vector.broadcast %cst_13 : f32 to vector<16x16xf32>
    %c0_14 = arith.constant 0 : index
    %c0_15 = arith.constant 0 : index
    %c0_16 = arith.constant 0 : index
    %c0_17 = arith.constant 0 : index
    %55 = vector.load %arg1[%c0_14, %c0_15, %c0_16, %c0_17] : memref<1x2x16x16xf32, #tpu.memory_space<vmem>>, vector<1x1x16x16xf32>
    %56 = vector.shape_cast %55 : vector<1x1x16x16xf32> to vector<16x16xf32>
    %57 = tpu.iota {dimensions = array<i32: 1>} : vector<16x16xi32>
    %c1_i32_18 = arith.constant 1 : i32
    %58 = tpu.dynamic_rotate %56 by %c1_i32_18 dim 1 : vector<16x16xf32>, i32 -> vector<16x16xf32>
    %59 = arith.addf %56, %58 : vector<16x16xf32>
    %c15_i32_19 = arith.constant 15 : i32
    %60 = tpu.dynamic_rotate %56 by %c15_i32_19 dim 1 : vector<16x16xf32>, i32 -> vector<16x16xf32>
    %61 = arith.addf %59, %60 : vector<16x16xf32>
    %62 = vector.extract_strided_slice %56 {offsets = [0, 0], sizes = [16, 1], strides = [1, 1]} : vector<16x16xf32> to vector<16x1xf32>
    %63 = vector.shape_cast %62 : vector<16x1xf32> to vector<16x1xf32>
    %64 = vector.broadcast %63 : vector<16x1xf32> to vector<16x16xf32>
    %65 = vector.extract_strided_slice %56 {offsets = [0, 15], sizes = [16, 1], strides = [1, 1]} : vector<16x16xf32> to vector<16x1xf32>
    %66 = vector.shape_cast %65 : vector<16x1xf32> to vector<16x1xf32>
    %67 = vector.broadcast %66 : vector<16x1xf32> to vector<16x16xf32>
    %c0_i32_20 = arith.constant 0 : i32
    %68 = vector.broadcast %c0_i32_20 : i32 to vector<16x16xi32>
    %69 = arith.cmpi eq, %57, %68 : vector<16x16xi32>
    %cst_21 = arith.constant 0.000000e+00 : f32
    %70 = vector.broadcast %cst_21 : f32 to vector<16x16xf32>
    %71 = arith.select %69, %67, %70 : vector<16x16xi1>, vector<16x16xf32>
    %72 = arith.subf %61, %71 : vector<16x16xf32>
    %c15_i32_22 = arith.constant 15 : i32
    %73 = vector.broadcast %c15_i32_22 : i32 to vector<16x16xi32>
    %74 = arith.cmpi eq, %57, %73 : vector<16x16xi32>
    %cst_23 = arith.constant 0.000000e+00 : f32
    %75 = vector.broadcast %cst_23 : f32 to vector<16x16xf32>
    %76 = arith.select %74, %64, %75 : vector<16x16xi1>, vector<16x16xf32>
    %77 = arith.subf %72, %76 : vector<16x16xf32>
    %78 = tpu.iota {dimensions = array<i32: 0>} : vector<16x16xi32>
    %c1_i32_24 = arith.constant 1 : i32
    %79 = tpu.dynamic_rotate %77 by %c1_i32_24 dim 0 : vector<16x16xf32>, i32 -> vector<16x16xf32>
    %80 = arith.addf %77, %79 : vector<16x16xf32>
    %c15_i32_25 = arith.constant 15 : i32
    %81 = tpu.dynamic_rotate %77 by %c15_i32_25 dim 0 : vector<16x16xf32>, i32 -> vector<16x16xf32>
    %82 = arith.addf %80, %81 : vector<16x16xf32>
    %83 = vector.extract_strided_slice %77 {offsets = [0, 0], sizes = [1, 16], strides = [1, 1]} : vector<16x16xf32> to vector<1x16xf32>
    %84 = vector.shape_cast %83 : vector<1x16xf32> to vector<1x16xf32>
    %85 = vector.broadcast %84 : vector<1x16xf32> to vector<16x16xf32>
    %86 = vector.extract_strided_slice %77 {offsets = [15, 0], sizes = [1, 16], strides = [1, 1]} : vector<16x16xf32> to vector<1x16xf32>
    %87 = vector.shape_cast %86 : vector<1x16xf32> to vector<1x16xf32>
    %88 = vector.broadcast %87 : vector<1x16xf32> to vector<16x16xf32>
    %c0_i32_26 = arith.constant 0 : i32
    %89 = vector.broadcast %c0_i32_26 : i32 to vector<16x16xi32>
    %90 = arith.cmpi eq, %78, %89 : vector<16x16xi32>
    %cst_27 = arith.constant 0.000000e+00 : f32
    %91 = vector.broadcast %cst_27 : f32 to vector<16x16xf32>
    %92 = arith.select %90, %88, %91 : vector<16x16xi1>, vector<16x16xf32>
    %93 = arith.subf %82, %92 : vector<16x16xf32>
    %c15_i32_28 = arith.constant 15 : i32
    %94 = vector.broadcast %c15_i32_28 : i32 to vector<16x16xi32>
    %95 = arith.cmpi eq, %78, %94 : vector<16x16xi32>
    %cst_29 = arith.constant 0.000000e+00 : f32
    %96 = vector.broadcast %cst_29 : f32 to vector<16x16xf32>
    %97 = arith.select %95, %85, %96 : vector<16x16xi1>, vector<16x16xf32>
    %98 = arith.subf %93, %97 : vector<16x16xf32>
    %cst_30 = arith.constant 9.000000e+00 : f32
    %99 = vector.broadcast %cst_30 : f32 to vector<16x16xf32>
    %100 = arith.mulf %99, %56 : vector<16x16xf32>
    %101 = arith.subf %98, %100 : vector<16x16xf32>
    %102 = arith.mulf %101, %101 : vector<16x16xf32>
    %103 = arith.addf %53, %102 : vector<16x16xf32>
    %c0_i32_31 = arith.constant 0 : i32
    %104 = vector.broadcast %c0_i32_31 : i32 to vector<16x16xi32>
    %105 = arith.cmpi eq, %1, %104 : vector<16x16xi32>
    %106 = arith.extui %105 : vector<16x16xi1> to vector<16x16xi32>
    %107 = arith.sitofp %106 : vector<16x16xi32> to vector<16x16xf32>
    %108 = math.log %56 : vector<16x16xf32>
    %cst_32 = arith.constant -1.000000e+02 : f32
    %109 = vector.broadcast %cst_32 : f32 to vector<16x16xf32>
    %110 = arith.maximumf %108, %109 : vector<16x16xf32>
    %cst_33 = arith.constant 1.000000e+00 : f32
    %111 = vector.broadcast %cst_33 : f32 to vector<16x16xf32>
    %112 = arith.subf %111, %56 : vector<16x16xf32>
    %113 = math.log %112 : vector<16x16xf32>
    %cst_34 = arith.constant -1.000000e+02 : f32
    %114 = vector.broadcast %cst_34 : f32 to vector<16x16xf32>
    %115 = arith.maximumf %113, %114 : vector<16x16xf32>
    %116 = arith.mulf %107, %110 : vector<16x16xf32>
    %117 = arith.addf %54, %116 : vector<16x16xf32>
    %cst_35 = arith.constant 1.000000e+00 : f32
    %118 = vector.broadcast %cst_35 : f32 to vector<16x16xf32>
    %119 = arith.subf %118, %107 : vector<16x16xf32>
    %120 = arith.mulf %119, %115 : vector<16x16xf32>
    %121 = arith.addf %117, %120 : vector<16x16xf32>
    %c0_36 = arith.constant 0 : index
    %c1 = arith.constant 1 : index
    %c0_37 = arith.constant 0 : index
    %c0_38 = arith.constant 0 : index
    %122 = vector.load %arg1[%c0_36, %c1, %c0_37, %c0_38] : memref<1x2x16x16xf32, #tpu.memory_space<vmem>>, vector<1x1x16x16xf32>
    %123 = vector.shape_cast %122 : vector<1x1x16x16xf32> to vector<16x16xf32>
    %124 = tpu.iota {dimensions = array<i32: 1>} : vector<16x16xi32>
    %c1_i32_39 = arith.constant 1 : i32
    %125 = tpu.dynamic_rotate %123 by %c1_i32_39 dim 1 : vector<16x16xf32>, i32 -> vector<16x16xf32>
    %126 = arith.addf %123, %125 : vector<16x16xf32>
    %c15_i32_40 = arith.constant 15 : i32
    %127 = tpu.dynamic_rotate %123 by %c15_i32_40 dim 1 : vector<16x16xf32>, i32 -> vector<16x16xf32>
    %128 = arith.addf %126, %127 : vector<16x16xf32>
    %129 = vector.extract_strided_slice %123 {offsets = [0, 0], sizes = [16, 1], strides = [1, 1]} : vector<16x16xf32> to vector<16x1xf32>
    %130 = vector.shape_cast %129 : vector<16x1xf32> to vector<16x1xf32>
    %131 = vector.broadcast %130 : vector<16x1xf32> to vector<16x16xf32>
    %132 = vector.extract_strided_slice %123 {offsets = [0, 15], sizes = [16, 1], strides = [1, 1]} : vector<16x16xf32> to vector<16x1xf32>
    %133 = vector.shape_cast %132 : vector<16x1xf32> to vector<16x1xf32>
    %134 = vector.broadcast %133 : vector<16x1xf32> to vector<16x16xf32>
    %c0_i32_41 = arith.constant 0 : i32
    %135 = vector.broadcast %c0_i32_41 : i32 to vector<16x16xi32>
    %136 = arith.cmpi eq, %124, %135 : vector<16x16xi32>
    %cst_42 = arith.constant 0.000000e+00 : f32
    %137 = vector.broadcast %cst_42 : f32 to vector<16x16xf32>
    %138 = arith.select %136, %134, %137 : vector<16x16xi1>, vector<16x16xf32>
    %139 = arith.subf %128, %138 : vector<16x16xf32>
    %c15_i32_43 = arith.constant 15 : i32
    %140 = vector.broadcast %c15_i32_43 : i32 to vector<16x16xi32>
    %141 = arith.cmpi eq, %124, %140 : vector<16x16xi32>
    %cst_44 = arith.constant 0.000000e+00 : f32
    %142 = vector.broadcast %cst_44 : f32 to vector<16x16xf32>
    %143 = arith.select %141, %131, %142 : vector<16x16xi1>, vector<16x16xf32>
    %144 = arith.subf %139, %143 : vector<16x16xf32>
    %145 = tpu.iota {dimensions = array<i32: 0>} : vector<16x16xi32>
    %c1_i32_45 = arith.constant 1 : i32
    %146 = tpu.dynamic_rotate %144 by %c1_i32_45 dim 0 : vector<16x16xf32>, i32 -> vector<16x16xf32>
    %147 = arith.addf %144, %146 : vector<16x16xf32>
    %c15_i32_46 = arith.constant 15 : i32
    %148 = tpu.dynamic_rotate %144 by %c15_i32_46 dim 0 : vector<16x16xf32>, i32 -> vector<16x16xf32>
    %149 = arith.addf %147, %148 : vector<16x16xf32>
    %150 = vector.extract_strided_slice %144 {offsets = [0, 0], sizes = [1, 16], strides = [1, 1]} : vector<16x16xf32> to vector<1x16xf32>
    %151 = vector.shape_cast %150 : vector<1x16xf32> to vector<1x16xf32>
    %152 = vector.broadcast %151 : vector<1x16xf32> to vector<16x16xf32>
    %153 = vector.extract_strided_slice %144 {offsets = [15, 0], sizes = [1, 16], strides = [1, 1]} : vector<16x16xf32> to vector<1x16xf32>
    %154 = vector.shape_cast %153 : vector<1x16xf32> to vector<1x16xf32>
    %155 = vector.broadcast %154 : vector<1x16xf32> to vector<16x16xf32>
    %c0_i32_47 = arith.constant 0 : i32
    %156 = vector.broadcast %c0_i32_47 : i32 to vector<16x16xi32>
    %157 = arith.cmpi eq, %145, %156 : vector<16x16xi32>
    %cst_48 = arith.constant 0.000000e+00 : f32
    %158 = vector.broadcast %cst_48 : f32 to vector<16x16xf32>
    %159 = arith.select %157, %155, %158 : vector<16x16xi1>, vector<16x16xf32>
    %160 = arith.subf %149, %159 : vector<16x16xf32>
    %c15_i32_49 = arith.constant 15 : i32
    %161 = vector.broadcast %c15_i32_49 : i32 to vector<16x16xi32>
    %162 = arith.cmpi eq, %145, %161 : vector<16x16xi32>
    %cst_50 = arith.constant 0.000000e+00 : f32
    %163 = vector.broadcast %cst_50 : f32 to vector<16x16xf32>
    %164 = arith.select %162, %152, %163 : vector<16x16xi1>, vector<16x16xf32>
    %165 = arith.subf %160, %164 : vector<16x16xf32>
    %cst_51 = arith.constant 9.000000e+00 : f32
    %166 = vector.broadcast %cst_51 : f32 to vector<16x16xf32>
    %167 = arith.mulf %166, %123 : vector<16x16xf32>
    %168 = arith.subf %165, %167 : vector<16x16xf32>
    %169 = arith.mulf %168, %168 : vector<16x16xf32>
    %170 = arith.addf %103, %169 : vector<16x16xf32>
    %c1_i32_52 = arith.constant 1 : i32
    %171 = vector.broadcast %c1_i32_52 : i32 to vector<16x16xi32>
    %172 = arith.cmpi eq, %1, %171 : vector<16x16xi32>
    %173 = arith.extui %172 : vector<16x16xi1> to vector<16x16xi32>
    %174 = arith.sitofp %173 : vector<16x16xi32> to vector<16x16xf32>
    %175 = math.log %123 : vector<16x16xf32>
    %cst_53 = arith.constant -1.000000e+02 : f32
    %176 = vector.broadcast %cst_53 : f32 to vector<16x16xf32>
    %177 = arith.maximumf %175, %176 : vector<16x16xf32>
    %cst_54 = arith.constant 1.000000e+00 : f32
    %178 = vector.broadcast %cst_54 : f32 to vector<16x16xf32>
    %179 = arith.subf %178, %123 : vector<16x16xf32>
    %180 = math.log %179 : vector<16x16xf32>
    %cst_55 = arith.constant -1.000000e+02 : f32
    %181 = vector.broadcast %cst_55 : f32 to vector<16x16xf32>
    %182 = arith.maximumf %180, %181 : vector<16x16xf32>
    %183 = arith.mulf %174, %177 : vector<16x16xf32>
    %184 = arith.addf %121, %183 : vector<16x16xf32>
    %cst_56 = arith.constant 1.000000e+00 : f32
    %185 = vector.broadcast %cst_56 : f32 to vector<16x16xf32>
    %186 = arith.subf %185, %174 : vector<16x16xf32>
    %187 = arith.mulf %186, %182 : vector<16x16xf32>
    %188 = arith.addf %184, %187 : vector<16x16xf32>
    %cst_57 = arith.constant 1.000000e+00 : f32
    %189 = vector.broadcast %cst_57 : f32 to vector<16x16xf32>
    %190 = arith.addf %170, %189 : vector<16x16xf32>
    %191 = arith.divf %170, %190 : vector<16x16xf32>
    %cst_58 = arith.constant dense<0.000000e+00> : vector<16xf32>
    %192 = vector.multi_reduction <add>, %188, %cst_58 [1] : vector<16x16xf32> to vector<16xf32>
    %193 = vector.shape_cast %192 : vector<16xf32> to vector<16x1xf32>
    %cst_59 = arith.constant dense<0.000000e+00> : vector<1xf32>
    %194 = vector.multi_reduction <add>, %193, %cst_59 [0] : vector<16x1xf32> to vector<1xf32>
    %195 = vector.shape_cast %194 : vector<1xf32> to vector<1x1xf32>
    %cst_60 = arith.constant 0.000000e+00 : f32
    %196 = vector.broadcast %cst_60 : f32 to vector<1x1xf32>
    %197 = arith.subf %196, %195 : vector<1x1xf32>
    %c0_61 = arith.constant 0 : index
    %c0_62 = arith.constant 0 : index
    %c0_63 = arith.constant 0 : index
    %198 = vector.load %arg3[%c0_61, %c0_62, %c0_63] : memref<1x1x1xf32, #tpu.memory_space<vmem>>, vector<1x1x1xf32>
    %199 = vector.shape_cast %198 : vector<1x1x1xf32> to vector<1x1xf32>
    %200 = vector.shape_cast %197 : vector<1x1xf32> to vector<1x1x1xf32>
    tpu.vector_store %arg3[%c0_61, %c0_62, %c0_63], %200 {strides = array<i32>} : memref<1x1x1xf32, #tpu.memory_space<vmem>>, vector<1x1x1xf32>,
    %201 = arith.mulf %191, %52 : vector<16x16xf32>
    %cst_64 = arith.constant dense<0.000000e+00> : vector<16xf32>
    %202 = vector.multi_reduction <add>, %201, %cst_64 [1] : vector<16x16xf32> to vector<16xf32>
    %203 = vector.shape_cast %202 : vector<16xf32> to vector<16x1xf32>
    %cst_65 = arith.constant dense<0.000000e+00> : vector<1xf32>
    %204 = vector.multi_reduction <add>, %203, %cst_65 [0] : vector<16x1xf32> to vector<1xf32>
    %205 = vector.shape_cast %204 : vector<1xf32> to vector<1x1xf32>
    %206 = arith.mulf %191, %191 : vector<16x16xf32>
    %207 = arith.mulf %52, %52 : vector<16x16xf32>
    %208 = arith.addf %206, %207 : vector<16x16xf32>
    %cst_66 = arith.constant dense<0.000000e+00> : vector<16xf32>
    %209 = vector.multi_reduction <add>, %208, %cst_66 [1] : vector<16x16xf32> to vector<16xf32>
    %210 = vector.shape_cast %209 : vector<16xf32> to vector<16x1xf32>
    %cst_67 = arith.constant dense<0.000000e+00> : vector<1xf32>
    %211 = vector.multi_reduction <add>, %210, %cst_67 [0] : vector<16x1xf32> to vector<1xf32>
    %212 = vector.shape_cast %211 : vector<1xf32> to vector<1x1xf32>
    %cst_68 = arith.constant 2.000000e+00 : f32
    %213 = vector.broadcast %cst_68 : f32 to vector<1x1xf32>
    %214 = arith.mulf %213, %205 : vector<1x1xf32>
    %cst_69 = arith.constant 1.000000e+00 : f32
    %215 = vector.broadcast %cst_69 : f32 to vector<1x1xf32>
    %216 = arith.addf %214, %215 : vector<1x1xf32>
    %cst_70 = arith.constant 1.000000e+00 : f32
    %217 = vector.broadcast %cst_70 : f32 to vector<1x1xf32>
    %218 = arith.addf %212, %217 : vector<1x1xf32>
    %219 = tpu.reciprocal %218 : vector<1x1xf32> -> vector<1x1xf32>
    %220 = arith.mulf %216, %219 : vector<1x1xf32>
    %cst_71 = arith.constant 1.000000e+00 : f32
    %221 = vector.broadcast %cst_71 : f32 to vector<1x1xf32>
    %222 = arith.subf %221, %220 : vector<1x1xf32>
    %c0_72 = arith.constant 0 : index
    %c0_73 = arith.constant 0 : index
    %c0_74 = arith.constant 0 : index
    %223 = vector.load %arg4[%c0_72, %c0_73, %c0_74] : memref<1x1x1xf32, #tpu.memory_space<vmem>>, vector<1x1x1xf32>
    %224 = vector.shape_cast %223 : vector<1x1x1xf32> to vector<1x1xf32>
    %225 = vector.shape_cast %222 : vector<1x1xf32> to vector<1x1x1xf32>
    tpu.vector_store %arg4[%c0_72, %c0_73, %c0_74], %225 {strides = array<i32>} : memref<1x1x1xf32, #tpu.memory_space<vmem>>, vector<1x1x1xf32>,
    return
  }
  func.func @transform_0(%arg0: i32) -> (i32, i32, i32, i32) {
    %c0_i32 = arith.constant 0 : i32
    %c0_i32_0 = arith.constant 0 : i32
    %c0_i32_1 = arith.constant 0 : i32
    %c0_i32_2 = arith.constant 0 : i32
    return %arg0, %c0_i32, %c0_i32_0, %c0_i32_1 : i32, i32, i32, i32
  }
  func.func @transform_1(%arg0: i32) -> (i32, i32, i32) {
    %c0_i32 = arith.constant 0 : i32
    %c0_i32_0 = arith.constant 0 : i32
    %c0_i32_1 = arith.constant 0 : i32
    return %arg0, %c0_i32, %c0_i32_0 : i32, i32, i32
  }
  func.func @transform_2(%arg0: i32) -> (i32, i32, i32) {
    %c0_i32 = arith.constant 0 : i32
    %c0_i32_0 = arith.constant 0 : i32
    %c0_i32_1 = arith.constant 0 : i32
    return %arg0, %c0_i32, %c0_i32_0 : i32, i32, i32
  }
  func.func @transform_3(%arg0: i32) -> (i32, i32, i32) {
    %c0_i32 = arith.constant 0 : i32
    %c0_i32_0 = arith.constant 0 : i32
    %c0_i32_1 = arith.constant 0 : i32
    return %arg0, %c0_i32, %c0_i32_0 : i32, i32, i32
  }
}

</mosaic_0001>

<llo_original>
// kernel: tpu_custom_call.1
$region0: #{tpu_custom_call.1}
  #allocation0 [shape = 'u32[]', space=smem, size = 0x4, offset = 0x4, fixed_abs, tag = 'smem constant byte address 0x4 - core index']
  #allocation1 [shape = 'u32[72,128]{1,0:T(1,128)}', space=vmem, size = 0x9000, scoped, tag = 'internal scratch']
  %s0 = inlined_call_operand.hbm [shape: f32[2,2,16,16], index: 0, kind: input, shape index: {}]
  %s1 = inlined_call_operand.hbm [shape: s32[2,16,16], index: 1, kind: input, shape index: {}]
  %s2 = inlined_call_operand.vmem [shape: f32[2,1,1], index: 2, kind: output, shape index: {0}]
  %s3 = inlined_call_operand.vmem [shape: f32[2,1,1], index: 3, kind: output, shape index: {1}]
  %4 = xla_tuple %s2, %s3
  %s5 = sld [smem:[#allocation0]]
  $region57: #{tpu_custom_call.1} parent=0
    _
  %s7 = ssub.s32 1, %s5
  %s8 = scalar_select 0, %s7, %s5
  $region1: #{tpu_custom_call.1} parent=0
    #allocation2 [shape = 'u8[32768]{0}', space=vmem, size = 0x8000, scoped, tag = 'input window, operand 0']
    #allocation3 [shape = 's32[2]{0}', space=sflag, size = 0x8, scoped, tag = 'scoped memory for tpu_custom_call.1']
    #allocation4 [shape = 'u8[16384]{0}', space=vmem, size = 0x4000, scoped, tag = 'input window, operand 1']
    #allocation5 [shape = 's32[2]{0}', space=sflag, size = 0x8, scoped, tag = 'scoped memory for tpu_custom_call.1']
    %9 = vsyncpa [#allocation3], 0
    %s10 = scalar_lea.sflag [#allocation3], 1
    %11 = vsyncpa %s10, 0
    %12 = vsyncpa [#allocation5], 0
    %s13 = scalar_lea.sflag [#allocation5], 1
    %14 = vsyncpa %s13, 0
    loop: start=0, step=1, limit=4
    $region2: #{tpu_custom_call.1} parent=1 // loop_pre_header
      _
    $region3: #{tpu_custom_call.1} parent=1 // loop_header
      %s16 = sphi 0, %s20
      %p17 = scmp.ge.s32.totalorder %s16, 4
      %s26 = sphi 0, %s28
      %s29 = sphi 0, %s26
      %s30 = sphi 0, %s29
      %s46 = sphi 0, %s30
      %s52 = sphi 0, %s54
      %s55 = sphi 0, %s52
      %s56 = sphi 0, %s55
      %s72 = sphi 0, %s56
      %s78 = sphi 0, %s80
      %s81 = sphi 0, %s78
      %s82 = sphi 0, %s81
      %s98 = sphi 0, %s82
      %s104 = sphi 0, %s106
      %s107 = sphi 0, %s104
      %s108 = sphi 0, %s107
      %s124 = sphi 0, %s108
    $region4: #{tpu_custom_call.1} parent=1 // loop_header_branch
      %19 = sbr.rel (%p17) target = $region8
    $region5: #{tpu_custom_call.1} parent=1 // loop_body
      %s21 = ssub.s32 %s16, 1
      %s22 = ssub.s32 %s16, 2
      %s23 = sadd.s32 %s16, 1
      %s24 = ssub.s32 %s16, %s23
      %p25 = scmp.eq.s32.totalorder %s24, 0
      %s27 = sadd.s32 %s26, 1
      %s28 = scalar_select %p25, %s26, %s27
      %p31 = pneg %p25
      %p32 = scmp.eq.s32.totalorder %s16, 1
      %p33 = por %p31, %p32
      %p34 = scmp.ne.s32.totalorder %s26, %s29
      %p35 = scmp.eq.s32.totalorder %s16, 0
      %p36 = por %p34, %p35
      %p37 = scmp.ne.s32.totalorder %s26, %s29
      %p38 = scmp.eq.s32.totalorder %s21, 1
      %p39 = por %p37, %p38
      %p40 = scmp.ne.s32.totalorder %s29, %s30
      %p41 = scmp.eq.s32.totalorder %s21, 0
      %p42 = por %p40, %p41
      %p43 = scmp.ne.s32.totalorder %s29, %s30
      %p44 = scmp.eq.s32.totalorder %s22, 1
      %p45 = por %p43, %p44
      %p47 = scmp.ne.s32.totalorder %s30, %s46
      %p48 = scmp.eq.s32.totalorder %s22, 0
      %p49 = por %p47, %p48
      %s50 = ssub.s32 %s16, %s23
      %p51 = scmp.eq.s32.totalorder %s50, 0
      %s53 = sadd.s32 %s52, 1
      %s54 = scalar_select %p51, %s52, %s53
      %p57 = pneg %p51
      %p58 = scmp.eq.s32.totalorder %s16, 1
      %p59 = por %p57, %p58
      %p60 = scmp.ne.s32.totalorder %s52, %s55
      %p61 = scmp.eq.s32.totalorder %s16, 0
      %p62 = por %p60, %p61
      %p63 = scmp.ne.s32.totalorder %s52, %s55
      %p64 = scmp.eq.s32.totalorder %s21, 1
      %p65 = por %p63, %p64
      %p66 = scmp.ne.s32.totalorder %s55, %s56
      %p67 = scmp.eq.s32.totalorder %s21, 0
      %p68 = por %p66, %p67
      %p69 = scmp.ne.s32.totalorder %s55, %s56
      %p70 = scmp.eq.s32.totalorder %s22, 1
      %p71 = por %p69, %p70
      %p73 = scmp.ne.s32.totalorder %s56, %s72
      %p74 = scmp.eq.s32.totalorder %s22, 0
      %p75 = por %p73, %p74
      %s76 = ssub.s32 %s16, %s23
      %p77 = scmp.eq.s32.totalorder %s76, 0
      %s79 = sadd.s32 %s78, 1
      %s80 = scalar_select %p77, %s78, %s79
      %p83 = pneg %p77
      %p84 = scmp.eq.s32.totalorder %s16, 1
      %p85 = por %p83, %p84
      %p86 = scmp.ne.s32.totalorder %s78, %s81
      %p87 = scmp.eq.s32.totalorder %s16, 0
      %p88 = por %p86, %p87
      %p89 = scmp.ne.s32.totalorder %s78, %s81
      %p90 = scmp.eq.s32.totalorder %s21, 1
      %p91 = por %p89, %p90
      %p92 = scmp.ne.s32.totalorder %s81, %s82
      %p93 = scmp.eq.s32.totalorder %s21, 0
      %p94 = por %p92, %p93
      %p95 = scmp.ne.s32.totalorder %s81, %s82
      %p96 = scmp.eq.s32.totalorder %s22, 1
      %p97 = por %p95, %p96
      %p99 = scmp.ne.s32.totalorder %s82, %s98
      %p100 = scmp.eq.s32.totalorder %s22, 0
      %p101 = por %p99, %p100
      %s102 = ssub.s32 %s16, %s23
      %p103 = scmp.eq.s32.totalorder %s102, 0
      %s105 = sadd.s32 %s104, 1
      %s106 = scalar_select %p103, %s104, %s105
      %p109 = pneg %p103
      %p110 = scmp.eq.s32.totalorder %s16, 1
      %p111 = por %p109, %p110
      %p112 = scmp.ne.s32.totalorder %s104, %s107
      %p113 = scmp.eq.s32.totalorder %s16, 0
      %p114 = por %p112, %p113
      %p115 = scmp.ne.s32.totalorder %s104, %s107
      %p116 = scmp.eq.s32.totalorder %s21, 1
      %p117 = por %p115, %p116
      %p118 = scmp.ne.s32.totalorder %s107, %s108
      %p119 = scmp.eq.s32.totalorder %s21, 0
      %p120 = por %p118, %p119
      %p121 = scmp.ne.s32.totalorder %s107, %s108
      %p122 = scmp.eq.s32.totalorder %s22, 1
      %p123 = por %p121, %p122
      %p125 = scmp.ne.s32.totalorder %s108, %s124
      %p126 = scmp.eq.s32.totalorder %s22, 0
      %p127 = por %p125, %p126
      %p128 = scmp.le.s32.totalorder 1, %s16
      %p129 = scmp.lt.s32.totalorder %s16, 3
      %p130 = pnand %p128, %p129
      %p131 = pneg %p130
      // Predicated region
      $region9: #{tpu_custom_call.1} parent=5 // pred_check
        _
      $region10: #{tpu_custom_call.1} parent=5 // pred_check_branch
        %133 = sbr.rel (%p130) target = $region12
      $region11: #{tpu_custom_call.1} parent=5 // pred_region
        %s134 = ssub.s32 %s16, 1
      $region12: #{tpu_custom_call.1} parent=5 // pred_fallthru
        _
      %p135 = scmp.lt.s32.totalorder %s16, 2
      // Predicated region
      $region13: #{tpu_custom_call.1} parent=5 // pred_check
        %p136 = pneg %p135
      $region14: #{tpu_custom_call.1} parent=5 // pred_check_branch
        %138 = sbr.rel (%p136) target = $region16
      $region15: #{tpu_custom_call.1} parent=5 // pred_region
        // Predicated region
        $region17: #{tpu_custom_call.1} parent=15 // pred_check
          %p139 = pneg %p36
        $region18: #{tpu_custom_call.1} parent=15 // pred_check_branch
          %141 = sbr.rel (%p139) target = $region20
        $region19: #{tpu_custom_call.1} parent=15 // pred_region
          %s142 = sand.u32 %s26, 1
          %s143 = scalar_lea.sflag [#allocation3], %s142
          %s144 = sand.u32 %s26, 1
          %s145 = smul.addr %s144, 32
          %s146 = scalar_lea.vmem [#allocation2], %s145
          %148 = vsyncadd %s143, 0
          %s149 = smul.addr %s16, 4
          %s150 = smul.addr %s149, 8
          %s151 = scalar_lea.hbm %s0, %s150
          %s152 = sshll.u32 %s151, 4
          %s153 = int_to_ptr.hbm [resolvable:$true] %s152
          %s154 = sshll.u32 %s146, 4
          %s155 = int_to_ptr.vmem [resolvable:$true] %s154
          %160 = dma.hbm_to_vmem [thread:$0]  %s153, 512, %s155, %s143, 128, 128, 8
        $region20: #{tpu_custom_call.1} parent=15 // pred_fallthru
          _
        // Predicated region
        $region21: #{tpu_custom_call.1} parent=15 // pred_check
          %p161 = pneg %p62
        $region22: #{tpu_custom_call.1} parent=15 // pred_check_branch
          %163 = sbr.rel (%p161) target = $region24
        $region23: #{tpu_custom_call.1} parent=15 // pred_region
          %s164 = sand.u32 %s52, 1
          %s165 = scalar_lea.sflag [#allocation5], %s164
          %s166 = sand.u32 %s52, 1
          %s167 = smul.addr %s166, 16
          %s168 = scalar_lea.vmem [#allocation4], %s167
          %170 = vsyncadd %s165, 0
          %s171 = smul.addr %s16, 2
          %s172 = smul.addr %s171, 8
          %s173 = scalar_lea.hbm %s1, %s172
          %s174 = sshll.u32 %s173, 4
          %s175 = int_to_ptr.hbm [resolvable:$true] %s174
          %s176 = sshll.u32 %s168, 4
          %s177 = int_to_ptr.vmem [resolvable:$true] %s176
          %182 = dma.hbm_to_vmem [thread:$0]  %s175, 256, %s177, %s165, 128, 128, 8
        $region24: #{tpu_custom_call.1} parent=15 // pred_fallthru
          _
      $region16: #{tpu_custom_call.1} parent=5 // pred_fallthru
        _
      %p183 = scmp.le.s32.totalorder 1, %s16
      %p184 = scmp.lt.s32.totalorder %s16, 3
      %p185 = pnand %p183, %p184
      %p186 = pneg %p185
      // Predicated region
      $region25: #{tpu_custom_call.1} parent=5 // pred_check
        _
      $region26: #{tpu_custom_call.1} parent=5 // pred_check_branch
        %188 = sbr.rel (%p185) target = $region28
      $region27: #{tpu_custom_call.1} parent=5 // pred_region
        %s189 = ssub.s32 %s16, 1
        %s190 = sand.u32 %s29, 1
        %s191 = scalar_lea.sflag [#allocation3], %s190
        %s192 = sand.u32 %s29, 1
        %s193 = smul.addr %s192, 32
        %s194 = scalar_lea.vmem [#allocation2], %s193
        // Predicated region
        $region29: #{tpu_custom_call.1} parent=27 // pred_check
          %p195 = pneg %p42
        $region30: #{tpu_custom_call.1} parent=27 // pred_check_branch
          %197 = sbr.rel (%p195) target = $region32
        $region31: #{tpu_custom_call.1} parent=27 // pred_region
          %199 = dma.done %s191, 512
        $region32: #{tpu_custom_call.1} parent=27 // pred_fallthru
          _
        %s200 = sand.u32 %s55, 1
        %s201 = scalar_lea.sflag [#allocation5], %s200
        %s202 = sand.u32 %s55, 1
        %s203 = smul.addr %s202, 16
        %s204 = scalar_lea.vmem [#allocation4], %s203
        // Predicated region
        $region33: #{tpu_custom_call.1} parent=27 // pred_check
          %p205 = pneg %p68
        $region34: #{tpu_custom_call.1} parent=27 // pred_check_branch
          %207 = sbr.rel (%p205) target = $region36
        $region35: #{tpu_custom_call.1} parent=27 // pred_region
          %209 = dma.done %s201, 256
        $region36: #{tpu_custom_call.1} parent=27 // pred_fallthru
          _
        %s210 = sand.u32 %s29, 1
        %s211 = scalar_lea.sflag [#allocation3], %s210
        %s212 = sand.u32 %s29, 1
        %s213 = smul.addr %s212, 32
        %s214 = scalar_lea.vmem [#allocation2], %s213
        %p215 = pneg %p42
        %p216 = pneg %p39
        %s217 = sand.u32 %s55, 1
        %s218 = scalar_lea.sflag [#allocation5], %s217
        %s219 = sand.u32 %s55, 1
        %s220 = smul.addr %s219, 16
        %s221 = scalar_lea.vmem [#allocation4], %s220
        %p222 = pneg %p68
        %p223 = pneg %p65
        %p224 = pneg %p94
        %p225 = pneg %p91
        %p226 = scmp.lt.s32.totalorder %s21, 1
        %s227 = scalar_select %p226, %s21, 1
        %s228 = scalar_lea.vmem %s2, %s227
        %p229 = pneg %p120
        %p230 = pneg %p117
        %p231 = scmp.lt.s32.totalorder %s21, 1
        %s232 = scalar_select %p231, %s21, 1
        %s233 = scalar_lea.vmem %s3, %s232
        %p234 = scmp.lt.s32.totalorder %s21, 1
        %s235 = scalar_select %p234, %s21, 1
        %s236 = scalar_lea.vmem %s2, %s235
        %p237 = scmp.lt.s32.totalorder %s21, 1
        %s238 = scalar_select %p237, %s21, 1
        %s239 = scalar_lea.vmem %s3, %s238
        %v240 = vld [vmem:[%s204] sm:$0xff]
        %v241 = vld [vmem:[%s204 + $0x8] sm:$0xff]
        %v242 = vcvt.s32.f32 %v240
        %v243 = vcvt.s32.f32 %v241
        %v244 = vlaneseq
        %v245 = vand.u32 %v244, 127
        %vm246 = vcmask 1047680
        %247 = vrot.lane.b32.xlu0 %v242, 16
        %v248 = vpop.permute.xlu0 %247
        %v249 = vsel %vm246, %v248, %v242
        %250 = vrot.lane.b32.xlu0 %v243, 16
        %v251 = vpop.permute.xlu0 %250
        %v252 = vsel %vm246, %v251, %v243
        %253 = vrot.lane.b32.xlu0 %v249, 16
        %v254 = vpop.permute.xlu0 %253
        %255 = vrot.lane.b32.xlu0 %v252, 16
        %v256 = vpop.permute.xlu0 %255
        %v257 = vsel %vm246, %v254, %v242
        %v258 = vsel %vm246, %v256, %v243
        %261 = vrot.lane.b32.xlu0 %v257, 113
        %v262 = vpop.permute.xlu0 %261
        %263 = vrot.lane.b32.xlu0 %v258, 113
        %v264 = vpop.permute.xlu0 %263
        %v267 = vadd.f32 %v242, %v262
        %v268 = vadd.f32 %v243, %v264
        %269 = vrot.lane.b32.xlu0 %v257, 127
        %v270 = vpop.permute.xlu0 %269
        %271 = vrot.lane.b32.xlu0 %v258, 127
        %v272 = vpop.permute.xlu0 %271
        %v275 = vadd.f32 %v267, %v270
        %v276 = vadd.f32 %v268, %v272
        %278 = vset.pattern.permute.xlu0 0
        %279 = vperm.xlu0 %278, %v242
        %v280 = vpop.permute.xlu0 %279
        %283 = vset.pattern.permute.xlu0 0
        %284 = vperm.xlu0 %283, %v243
        %v285 = vpop.permute.xlu0 %284
        %287 = vset.pattern.permute.xlu0 15
        %288 = vperm.xlu0 %287, %v242
        %v289 = vpop.permute.xlu0 %288
        %291 = vset.pattern.permute.xlu0 15
        %292 = vperm.xlu0 %291, %v243
        %v293 = vpop.permute.xlu0 %292
        %vm295 = vcmp.eq.s32.totalorder %v245, 0
        %v296 = vsel %vm295, %v289, 0.0
        %v297 = vsel %vm295, %v293, 0.0
        %v298 = vsub.f32 %v275, %v296
        %v299 = vsub.f32 %v276, %v297
        %vm300 = vcmp.eq.s32.totalorder %v245, 15
        %v301 = vsel %vm300, %v280, 0.0
        %v302 = vsel %vm300, %v285, 0.0
        %v303 = vsub.f32 %v298, %v301
        %v304 = vsub.f32 %v299, %v302
        %v305 = vlaneseq
        %v306 = vshrl.u32 %v305, 7
        %v307 = vadd.s32 %v306, 8
        %v308 = vrot.slane %v303, 7
        %v309 = vrot.slane %v304, 7
        %vm310 = vcmp.lt.s32.totalorder %v306, 1
        %v311 = vsel %vm310, %v308, %v309
        %v312 = vsel %vm310, %v309, %v308
        %v313 = vadd.f32 %v303, %v312
        %v314 = vadd.f32 %v304, %v311
        %v315 = vrot.slane %v303, 1
        %v316 = vrot.slane %v304, 1
        %vm317 = vcmp.lt.s32.totalorder %v306, 7
        %v318 = vsel %vm317, %v315, %v316
        %v319 = vsel %vm317, %v316, %v315
        %v320 = vadd.f32 %v313, %v318
        %v321 = vadd.f32 %v314, %v319
        %v322 = vperm.slane %v303, 0
        %v323 = vperm.slane %v304, 7
        %vm324 = vcmp.eq.s32.totalorder %v306, 0
        %vm325 = vcmp.eq.s32.totalorder %v307, 0
        %v326 = vsel %vm324, %v323, 0.0
        %v327 = vsel %vm325, %v323, 0.0
        %v328 = vsub.f32 %v320, %v326
        %v329 = vsub.f32 %v321, %v327
        %vm330 = vcmp.eq.s32.totalorder %v306, 15
        %vm331 = vcmp.eq.s32.totalorder %v307, 15
        %v332 = vsel %vm330, %v322, 0.0
        %v333 = vsel %vm331, %v322, 0.0
        %v334 = vsub.f32 %v328, %v332
        %v335 = vsub.f32 %v329, %v333
        %v336 = vmul.f32 %v242, 9.0
        %v337 = vmul.f32 %v243, 9.0
        %v338 = vsub.f32 %v334, %v336
        %v339 = vsub.f32 %v335, %v337
        %v340 = vand.u32 2147483647, %v338
        %v341 = vand.u32 2147483647, %v339
        %vm342 = vcmp.gt.f32.partialorder %v340, 0.5
        %vm343 = vcmp.gt.f32.partialorder %v341, 0.5
        %v344 = vsel %vm342, 1, 0
        %v345 = vsel %vm343, 1, 0
        %v346 = vcvt.s32.f32 %v344
        %v347 = vcvt.s32.f32 %v345
        %v348 = vld [vmem:[%s194] sm:$0xff]
        %v349 = vld [vmem:[%s194 + $0x8] sm:$0xff]
        %350 = vrot.lane.b32.xlu0 %v348, 16
        %v351 = vpop.permute.xlu0 %350
        %v352 = vsel %vm246, %v351, %v348
        %353 = vrot.lane.b32.xlu0 %v349, 16
        %v354 = vpop.permute.xlu0 %353
        %v355 = vsel %vm246, %v354, %v349
        %356 = vrot.lane.b32.xlu0 %v352, 16
        %v357 = vpop.permute.xlu0 %356
        %358 = vrot.lane.b32.xlu0 %v355, 16
        %v359 = vpop.permute.xlu0 %358
        %v360 = vsel %vm246, %v357, %v348
        %v361 = vsel %vm246, %v359, %v349
        %364 = vrot.lane.b32.xlu0 %v360, 113
        %v365 = vpop.permute.xlu0 %364
        %366 = vrot.lane.b32.xlu0 %v361, 113
        %v367 = vpop.permute.xlu0 %366
        %v370 = vadd.f32 %v348, %v365
        %v371 = vadd.f32 %v349, %v367
        %372 = vrot.lane.b32.xlu0 %v360, 127
        %v373 = vpop.permute.xlu0 %372
        %374 = vrot.lane.b32.xlu0 %v361, 127
        %v375 = vpop.permute.xlu0 %374
        %v378 = vadd.f32 %v370, %v373
        %v379 = vadd.f32 %v371, %v375
        %381 = vset.pattern.permute.xlu0 0
        %382 = vperm.xlu0 %381, %v348
        %v383 = vpop.permute.xlu0 %382
        %386 = vset.pattern.permute.xlu0 0
        %387 = vperm.xlu0 %386, %v349
        %v388 = vpop.permute.xlu0 %387
        %390 = vset.pattern.permute.xlu0 15
        %391 = vperm.xlu0 %390, %v348
        %v392 = vpop.permute.xlu0 %391
        %394 = vset.pattern.permute.xlu0 15
        %395 = vperm.xlu0 %394, %v349
        %v396 = vpop.permute.xlu0 %395
        %v398 = vsel %vm295, %v392, 0.0
        %v399 = vsel %vm295, %v396, 0.0
        %v400 = vsub.f32 %v378, %v398
        %v401 = vsub.f32 %v379, %v399
        %v402 = vsel %vm300, %v383, 0.0
        %v403 = vsel %vm300, %v388, 0.0
        %v404 = vsub.f32 %v400, %v402
        %v405 = vsub.f32 %v401, %v403
        %v406 = vrot.slane %v404, 7
        %v407 = vrot.slane %v405, 7
        %v408 = vsel %vm310, %v406, %v407
        %v409 = vsel %vm310, %v407, %v406
        %v410 = vadd.f32 %v404, %v409
        %v411 = vadd.f32 %v405, %v408
        %v412 = vrot.slane %v404, 1
        %v413 = vrot.slane %v405, 1
        %v414 = vsel %vm317, %v412, %v413
        %v415 = vsel %vm317, %v413, %v412
        %v416 = vadd.f32 %v410, %v414
        %v417 = vadd.f32 %v411, %v415
        %v418 = vperm.slane %v404, 0
        %v419 = vperm.slane %v405, 7
        %v420 = vsel %vm324, %v419, 0.0
        %v421 = vsel %vm325, %v419, 0.0
        %v422 = vsub.f32 %v416, %v420
        %v423 = vsub.f32 %v417, %v421
        %v424 = vsel %vm330, %v418, 0.0
        %v425 = vsel %vm331, %v418, 0.0
        %v426 = vsub.f32 %v422, %v424
        %v427 = vsub.f32 %v423, %v425
        %v428 = vmul.f32 %v348, 9.0
        %v429 = vmul.f32 %v349, 9.0
        %v430 = vsub.f32 %v426, %v428
        %v431 = vsub.f32 %v427, %v429
        %v432 = vmul.f32 %v430, %v430
        %v433 = vmul.f32 %v431, %v431
        %v434 = vadd.f32 %v432, 0.0
        %v435 = vadd.f32 %v433, 0.0
        %vm436 = vcmp.eq.s32.totalorder %v240, 0
        %vm437 = vcmp.eq.s32.totalorder %v241, 0
        %v438 = vsel %vm436, 1, 0
        %v439 = vsel %vm437, 1, 0
        %v440 = vcvt.s32.f32 %v438
        %v441 = vcvt.s32.f32 %v439
        %v442 = vlog2.pop %v348
        %v443 = vmul.f32 %v442, 0.6931472
        %v444 = vlog2.pop %v349
        %v445 = vmul.f32 %v444, 0.6931472
        %v446 = vmax.f32 %v443, -100.0
        %v447 = vmax.f32 %v445, -100.0
        %v448 = vsub.f32 1.0, %v348
        %v449 = vsub.f32 1.0, %v349
        %v450 = vlog2.pop %v448
        %v451 = vmul.f32 %v450, 0.6931472
        %v452 = vlog2.pop %v449
        %v453 = vmul.f32 %v452, 0.6931472
        %v454 = vmax.f32 %v451, -100.0
        %v455 = vmax.f32 %v453, -100.0
        %v456 = vmul.f32 %v440, %v446
        %v457 = vmul.f32 %v441, %v447
        %v458 = vadd.f32 %v456, 0.0
        %v459 = vadd.f32 %v457, 0.0
        %v460 = vsub.f32 1.0, %v440
        %v461 = vsub.f32 1.0, %v441
        %v462 = vmul.f32 %v460, %v454
        %v463 = vmul.f32 %v461, %v455
        %v464 = vadd.f32 %v458, %v462
        %v465 = vadd.f32 %v459, %v463
        %s466 = scalar_lea.vmem %s194, 16 [#allocation2]
        %v467 = vld [vmem:[%s466] sm:$0xff]
        %v468 = vld [vmem:[%s466 + $0x8] sm:$0xff]
        %469 = vrot.lane.b32.xlu0 %v467, 16
        %v470 = vpop.permute.xlu0 %469
        %v471 = vsel %vm246, %v470, %v467
        %472 = vrot.lane.b32.xlu0 %v468, 16
        %v473 = vpop.permute.xlu0 %472
        %v474 = vsel %vm246, %v473, %v468
        %475 = vrot.lane.b32.xlu0 %v471, 16
        %v476 = vpop.permute.xlu0 %475
        %477 = vrot.lane.b32.xlu0 %v474, 16
        %v478 = vpop.permute.xlu0 %477
        %v479 = vsel %vm246, %v476, %v467
        %v480 = vsel %vm246, %v478, %v468
        %483 = vrot.lane.b32.xlu0 %v479, 113
        %v484 = vpop.permute.xlu0 %483
        %485 = vrot.lane.b32.xlu0 %v480, 113
        %v486 = vpop.permute.xlu0 %485
        %v489 = vadd.f32 %v467, %v484
        %v490 = vadd.f32 %v468, %v486
        %491 = vrot.lane.b32.xlu0 %v479, 127
        %v492 = vpop.permute.xlu0 %491
        %493 = vrot.lane.b32.xlu0 %v480, 127
        %v494 = vpop.permute.xlu0 %493
        %v497 = vadd.f32 %v489, %v492
        %v498 = vadd.f32 %v490, %v494
        %500 = vset.pattern.permute.xlu0 0
        %501 = vperm.xlu0 %500, %v467
        %v502 = vpop.permute.xlu0 %501
        %505 = vset.pattern.permute.xlu0 0
        %506 = vperm.xlu0 %505, %v468
        %v507 = vpop.permute.xlu0 %506
        %509 = vset.pattern.permute.xlu0 15
        %510 = vperm.xlu0 %509, %v467
        %v511 = vpop.permute.xlu0 %510
        %513 = vset.pattern.permute.xlu0 15
        %514 = vperm.xlu0 %513, %v468
        %v515 = vpop.permute.xlu0 %514
        %v517 = vsel %vm295, %v511, 0.0
        %v518 = vsel %vm295, %v515, 0.0
        %v519 = vsub.f32 %v497, %v517
        %v520 = vsub.f32 %v498, %v518
        %v521 = vsel %vm300, %v502, 0.0
        %v522 = vsel %vm300, %v507, 0.0
        %v523 = vsub.f32 %v519, %v521
        %v524 = vsub.f32 %v520, %v522
        %v525 = vrot.slane %v523, 7
        %v526 = vrot.slane %v524, 7
        %v527 = vsel %vm310, %v525, %v526
        %v528 = vsel %vm310, %v526, %v525
        %v529 = vadd.f32 %v523, %v528
        %v530 = vadd.f32 %v524, %v527
        %v531 = vrot.slane %v523, 1
        %v532 = vrot.slane %v524, 1
        %v533 = vsel %vm317, %v531, %v532
        %v534 = vsel %vm317, %v532, %v531
        %v535 = vadd.f32 %v529, %v533
        %v536 = vadd.f32 %v530, %v534
        %v537 = vperm.slane %v523, 0
        %v538 = vperm.slane %v524, 7
        %v539 = vsel %vm324, %v538, 0.0
        %v540 = vsel %vm325, %v538, 0.0
        %v541 = vsub.f32 %v535, %v539
        %v542 = vsub.f32 %v536, %v540
        %v543 = vsel %vm330, %v537, 0.0
        %v544 = vsel %vm331, %v537, 0.0
        %v545 = vsub.f32 %v541, %v543
        %v546 = vsub.f32 %v542, %v544
        %v547 = vmul.f32 %v467, 9.0
        %v548 = vmul.f32 %v468, 9.0
        %v549 = vsub.f32 %v545, %v547
        %v550 = vsub.f32 %v546, %v548
        %v551 = vmul.f32 %v549, %v549
        %v552 = vmul.f32 %v550, %v550
        %v553 = vadd.f32 %v434, %v551
        %v554 = vadd.f32 %v435, %v552
        %vm555 = vcmp.eq.s32.totalorder %v240, 1
        %vm556 = vcmp.eq.s32.totalorder %v241, 1
        %v557 = vsel %vm555, 1, 0
        %v558 = vsel %vm556, 1, 0
        %v559 = vcvt.s32.f32 %v557
        %v560 = vcvt.s32.f32 %v558
        %v561 = vlog2.pop %v467
        %v562 = vmul.f32 %v561, 0.6931472
        %v563 = vlog2.pop %v468
        %v564 = vmul.f32 %v563, 0.6931472
        %v565 = vmax.f32 %v562, -100.0
        %v566 = vmax.f32 %v564, -100.0
        %v567 = vsub.f32 1.0, %v467
        %v568 = vsub.f32 1.0, %v468
        %v569 = vlog2.pop %v567
        %v570 = vmul.f32 %v569, 0.6931472
        %v571 = vlog2.pop %v568
        %v572 = vmul.f32 %v571, 0.6931472
        %v573 = vmax.f32 %v570, -100.0
        %v574 = vmax.f32 %v572, -100.0
        %v575 = vmul.f32 %v559, %v565
        %v576 = vmul.f32 %v560, %v566
        %v577 = vadd.f32 %v464, %v575
        %v578 = vadd.f32 %v465, %v576
        %v579 = vsub.f32 1.0, %v559
        %v580 = vsub.f32 1.0, %v560
        %v581 = vmul.f32 %v579, %v573
        %v582 = vmul.f32 %v580, %v574
        %v583 = vadd.f32 %v577, %v581
        %v584 = vadd.f32 %v578, %v582
        %v585 = vadd.f32 %v553, 1.0
        %v586 = vadd.f32 %v554, 1.0
        %v587 = vrcp.pop %v585
        %v588 = vmul.f32 %v585, %v587
        %v589 = vsub.f32 1.0, %v588
        %v590 = vmul.f32 %v587, %v589
        %v591 = vadd.f32 %v587, %v590
        %vm592 = vweird.f32 %v585
        %vm593 = vweird.f32 %v587
        %vm594 = vmor %vm592, %vm593
        %v595 = vsel %vm594, %v587, %v591
        %v596 = vand.u32 2147483647, %v585
        %vm597 = vcmp.eq.f32.partialorder %v596, 8.507059e+37
        %v598 = vand.u32 %v585, 2147483648
        %v599 = vor.u32 1.1754944e-38, %v598
        %v600 = vsel %vm597, %v599, %v595
        %v601 = vmul.f32 %v553, %v600
        %v602 = vrcp.pop %v586
        %v603 = vmul.f32 %v586, %v602
        %v604 = vsub.f32 1.0, %v603
        %v605 = vmul.f32 %v602, %v604
        %v606 = vadd.f32 %v602, %v605
        %vm607 = vweird.f32 %v586
        %vm608 = vweird.f32 %v602
        %vm609 = vmor %vm607, %vm608
        %v610 = vsel %vm609, %v602, %v606
        %v611 = vand.u32 2147483647, %v586
        %vm612 = vcmp.eq.f32.partialorder %v611, 8.507059e+37
        %v613 = vand.u32 %v586, 2147483648
        %v614 = vor.u32 1.1754944e-38, %v613
        %v615 = vsel %vm612, %v614, %v610
        %v616 = vmul.f32 %v554, %v615
        %vm617 = vcmask 130048
        %v618 = vsel %vm617, %v583, 0.0
        %619 = vadd.xlane.f32.xlu0 %v618
        %v620 = vpop.xlane.xlu0 %619
        %v621 = vsel %vm617, %v584, 0.0
        %622 = vadd.xlane.f32.xlu0 %v621
        %v623 = vpop.xlane.xlu0 %622
        %v624 = vadd.f32 %v620, %v623
        %v625 = vrot.slane %v624, 4
        %v626 = vadd.f32 %v624, %v625
        %v627 = vrot.slane %v626, 2
        %v628 = vadd.f32 %v626, %v627
        %v629 = vrot.slane %v628, 1
        %v630 = vadd.f32 %v628, %v629
        %v631 = vsub.f32 0.0, %v630
        %vm632 = vcmask 0
        %633 = vst.msk [vmem:[%s236] sm:$0x1] %vm632, %v631
        %v634 = vmul.f32 %v601, %v346
        %v635 = vmul.f32 %v616, %v347
        %v636 = vsel %vm617, %v634, 0.0
        %637 = vadd.xlane.f32.xlu0 %v636
        %v638 = vpop.xlane.xlu0 %637
        %v639 = vsel %vm617, %v635, 0.0
        %640 = vadd.xlane.f32.xlu0 %v639
        %v641 = vpop.xlane.xlu0 %640
        %v642 = vadd.f32 %v638, %v641
        %v643 = vrot.slane %v642, 4
        %v644 = vadd.f32 %v642, %v643
        %v645 = vrot.slane %v644, 2
        %v646 = vadd.f32 %v644, %v645
        %v647 = vrot.slane %v646, 1
        %v648 = vadd.f32 %v646, %v647
        %v649 = vmul.f32 %v601, %v601
        %v650 = vmul.f32 %v616, %v616
        %v651 = vmul.f32 %v346, %v346
        %v652 = vmul.f32 %v347, %v347
        %v653 = vadd.f32 %v649, %v651
        %v654 = vadd.f32 %v650, %v652
        %v655 = vsel %vm617, %v653, 0.0
        %656 = vadd.xlane.f32.xlu0 %v655
        %v657 = vpop.xlane.xlu0 %656
        %v658 = vsel %vm617, %v654, 0.0
        %659 = vadd.xlane.f32.xlu0 %v658
        %v660 = vpop.xlane.xlu0 %659
        %v661 = vadd.f32 %v657, %v660
        %v662 = vrot.slane %v661, 4
        %v663 = vadd.f32 %v661, %v662
        %v664 = vrot.slane %v663, 2
        %v665 = vadd.f32 %v663, %v664
        %v666 = vrot.slane %v665, 1
        %v667 = vadd.f32 %v665, %v666
        %v668 = vmul.f32 %v648, 2.0
        %v669 = vadd.f32 %v668, 1.0
        %v670 = vadd.f32 %v667, 1.0
        %v671 = vrcp.pop %v670
        %v672 = vmul.f32 %v670, %v671
        %v673 = vsub.f32 1.0, %v672
        %v674 = vmul.f32 %v671, %v673
        %v675 = vadd.f32 %v671, %v674
        %vm676 = vweird.f32 %v670
        %vm677 = vweird.f32 %v671
        %vm678 = vmor %vm676, %vm677
        %v679 = vsel %vm678, %v671, %v675
        %v680 = vand.u32 2147483647, %v670
        %vm681 = vcmp.eq.f32.partialorder %v680, 8.507059e+37
        %v682 = vand.u32 %v670, 2147483648
        %v683 = vor.u32 1.1754944e-38, %v682
        %v684 = vsel %vm681, %v683, %v679
        %v685 = vmul.f32 %v669, %v684
        %v686 = vsub.f32 1.0, %v685
        %687 = vst.msk [vmem:[%s239] sm:$0x1] %vm632, %v686
        %p688 = scmp.lt.s32.totalorder %s21, 1
        %s689 = scalar_select %p688, %s21, 1
        %s690 = scalar_lea.vmem %s2, %s689
        %p691 = scmp.lt.s32.totalorder %s21, 1
        %s692 = scalar_select %p691, %s21, 1
        %s693 = scalar_lea.vmem %s3, %s692
        // Predicated region
        $region37: #{tpu_custom_call.1} parent=27 // pred_check
          %p694 = pneg %p91
        $region38: #{tpu_custom_call.1} parent=27 // pred_check_branch
          %696 = sbr.rel (%p694) target = $region40
        $region39: #{tpu_custom_call.1} parent=27 // pred_region
          _
        $region40: #{tpu_custom_call.1} parent=27 // pred_fallthru
          _
        // Predicated region
        $region41: #{tpu_custom_call.1} parent=27 // pred_check
          %p697 = pneg %p117
        $region42: #{tpu_custom_call.1} parent=27 // pred_check_branch
          %699 = sbr.rel (%p697) target = $region44
        $region43: #{tpu_custom_call.1} parent=27 // pred_region
          _
        $region44: #{tpu_custom_call.1} parent=27 // pred_fallthru
          _
      $region28: #{tpu_custom_call.1} parent=5 // pred_fallthru
        _
      %p700 = scmp.le.s32.totalorder 2, %s16
      // Predicated region
      $region45: #{tpu_custom_call.1} parent=5 // pred_check
        %p701 = pneg %p700
      $region46: #{tpu_custom_call.1} parent=5 // pred_check_branch
        %703 = sbr.rel (%p701) target = $region48
      $region47: #{tpu_custom_call.1} parent=5 // pred_region
        %s704 = ssub.s32 %s16, 2
        // Predicated region
        $region49: #{tpu_custom_call.1} parent=47 // pred_check
          %p705 = pneg %p97
        $region50: #{tpu_custom_call.1} parent=47 // pred_check_branch
          %707 = sbr.rel (%p705) target = $region52
        $region51: #{tpu_custom_call.1} parent=47 // pred_region
          %p708 = scmp.lt.s32.totalorder %s22, 1
          %s709 = scalar_select %p708, %s22, 1
          %s710 = scalar_lea.vmem %s2, %s709
        $region52: #{tpu_custom_call.1} parent=47 // pred_fallthru
          _
        // Predicated region
        $region53: #{tpu_custom_call.1} parent=47 // pred_check
          %p711 = pneg %p123
        $region54: #{tpu_custom_call.1} parent=47 // pred_check_branch
          %713 = sbr.rel (%p711) target = $region56
        $region55: #{tpu_custom_call.1} parent=47 // pred_region
          %p714 = scmp.lt.s32.totalorder %s22, 1
          %s715 = scalar_select %p714, %s22, 1
          %s716 = scalar_lea.vmem %s3, %s715
        $region56: #{tpu_custom_call.1} parent=47 // pred_fallthru
          _
      $region48: #{tpu_custom_call.1} parent=5 // pred_fallthru
        _
    $region6: #{tpu_custom_call.1} parent=1 // loop_footer
      %s20 = sadd.s32 1, %s16
    $region7: #{tpu_custom_call.1} parent=1 // loop_footer_branch
      %15 = sbr.rel target = $region3
    $region8: #{tpu_custom_call.1} parent=1 // loop_exit
      _
    %717 = vsyncpa [#allocation3], 1
    %s718 = scalar_lea.sflag [#allocation3], 1
    %719 = vsyncpa %s718, 1
    %720 = vsyncpa [#allocation5], 1
    %s721 = scalar_lea.sflag [#allocation5], 1
    %722 = vsyncpa %s721, 1

</llo_original>
